<compile_context>
chip_gen: v7x
topology: tpu7x:2x2x1
jax: 0.10.0
libtpu: 0.0.40
codegen_flags: <defaults>
</compile_context>

<pallas_src>
import functools

import jax
import jax.numpy as jnp
from jax.experimental import pallas as pl
from jax.experimental.pallas import tpu as pltpu


def _ce_label_smooth_kernel(x_ref, t_ref, o_ref, *, epsilon, num_classes):
    # x_ref: (TB, C) logits tile in VMEM; t_ref: (TB, 1) int32 labels in VMEM
    # o_ref: (TB, 1) f32 per-row losses
    x = x_ref[...].astype(jnp.float32)                        # (TB, C)
    t = t_ref[...]                                            # (TB, 1) int32

    # numerically-stable log-softmax pieces over the class (lane) axis
    m = jnp.max(x, axis=-1, keepdims=True)                    # (TB, 1)
    shifted = x - m                                           # (TB, C)
    lse = jnp.log(jnp.sum(jnp.exp(shifted), axis=-1, keepdims=True))  # (TB, 1)

    # shifted[row, target[row]] via iota-compare (no scatter/gather needed)
    col = jax.lax.broadcasted_iota(jnp.int32, x.shape, 1)     # (TB, C)
    picked = jnp.sum(jnp.where(col == t, shifted, 0.0), axis=-1, keepdims=True)
    row_sum = jnp.sum(shifted, axis=-1, keepdims=True)        # sum_c shifted

    # sum_c( -[(1-eps)*onehot + eps/C] * log_probs )  in closed form per row
    loss_rows = (-(1.0 - epsilon) * (picked - lse)
                 - (epsilon / num_classes) * (row_sum - num_classes * lse))
    o_ref[...] = loss_rows


def _choose_tile_b(batch, num_classes, itemsize):
    # keep 2 (double-buffer) x TB x C x 4B around ~4 MiB -> safe on v5e/v6e/v7x
    budget = 4 * 1024 * 1024
    per_row = 2 * num_classes * max(int(itemsize), 4)
    tb = budget // max(1, per_row)
    tb = int(max(16, min(tb, 512)))
    tb -= tb % 16                      # multiple of 16: covers bf16 (16,128) tiles
    if batch <= tb:
        return batch                   # single tile == full batch dim (always legal)
    return tb


def cross_entropy_label_smooth(logits, targets, epsilon=0.1, tile_b=None):
    """logits: (B, C) f32/bf16, targets: (B,) int labels -> scalar f32 loss."""
    B, C = logits.shape
    t2 = targets.reshape(B, 1).astype(jnp.int32)
    if tile_b is None:
        tile_b = _choose_tile_b(B, C, logits.dtype.itemsize)
    tile_b = int(min(tile_b, B))
    num_tiles = pl.cdiv(B, tile_b)

    kernel = functools.partial(
        _ce_label_smooth_kernel, epsilon=float(epsilon), num_classes=int(C)
    )

    per_row = pl.pallas_call(
        kernel,
        out_shape=jax.ShapeDtypeStruct((B, 1), jnp.float32),
        grid=(num_tiles,),
        in_specs=[
            pl.BlockSpec((tile_b, C), lambda i: (i, 0)),
            pl.BlockSpec((tile_b, 1), lambda i: (i, 0)),
        ],
        out_specs=pl.BlockSpec((tile_b, 1), lambda i: (i, 0)),
        compiler_params=pltpu.CompilerParams(
            dimension_semantics=("parallel",),
            vmem_limit_bytes=32 * 1024 * 1024,
        ),
        cost_estimate=pl.CostEstimate(
            flops=6 * B * C,
            transcendentals=B * C,
            bytes_accessed=B * C * logits.dtype.itemsize + 2 * B * 4,
        ),
    )(logits, t2)

    # tiny final reduction in plain XLA: (-smoothed * log_probs).mean(0).sum()
    return jnp.sum(per_row) / B


def _reference(logits, targets, epsilon=0.1):
    B, C = logits.shape
    log_probs = jax.nn.log_softmax(logits.astype(jnp.float32), axis=1)
    onehot = jax.nn.one_hot(targets, C, dtype=jnp.float32)
    smoothed = (1.0 - epsilon) * onehot + epsilon / C
    return jnp.sum(jnp.mean(-smoothed * log_probs, axis=0))


if __name__ == "__main__":
    B, C = 128, 384          # small synthetic classification shapes
    eps = 0.1

    key = jax.random.PRNGKey(0)
    k_logits, k_tgt = jax.random.split(key)
    logits = jax.random.normal(k_logits, (B, C), dtype=jnp.float32)
    targets = jax.random.randint(k_tgt, (B,), 0, C, dtype=jnp.int32)

    # force a 4-step batch grid so the pipelined/parallel path is exercised
    loss = cross_entropy_label_smooth(logits, targets, epsilon=eps, tile_b=32)
    loss = jax.block_until_ready(loss)
    ref = _reference(logits, targets, epsilon=eps)
    assert jnp.allclose(loss, ref, rtol=1e-5, atol=1e-5), (loss, ref)

    # bf16 logits path (halves HBM traffic for this bandwidth-bound op)
    loss_bf16 = cross_entropy_label_smooth(
        logits.astype(jnp.bfloat16), targets, epsilon=eps, tile_b=32)
    loss_bf16 = jax.block_until_ready(loss_bf16)
    ref_bf16 = _reference(logits.astype(jnp.bfloat16), targets, epsilon=eps)
    assert jnp.allclose(loss_bf16, ref_bf16, rtol=2e-2, atol=2e-2), (loss_bf16, ref_bf16)

    print("KERNEL_OK")
</pallas_src>

<mosaic_0001>
module attributes {stable_mosaic.version = 11 : i64} {
  func.func @_ce_label_smooth_kernel(%arg0: i32, %arg1: memref<32x384xf32, #tpu.memory_space<vmem>>, %arg2: memref<32x1xi32, #tpu.memory_space<vmem>>, %arg3: memref<32x1xf32, #tpu.memory_space<vmem>>) attributes {dimension_semantics = [#tpu.dimension_semantics<parallel>], iteration_bounds = array<i64: 4>, scalar_prefetch = 0 : i64, scratch_operands = 0 : i64, tpu.core_type = #tpu.core_type<tc>, window_params = [{transform_indices = @transform_0, window_bounds = array<i64: 32, 384>}, {transform_indices = @transform_1, window_bounds = array<i64: 32, 1>}, {transform_indices = @transform_2, window_bounds = array<i64: 32, 1>}]} {
    %c0 = arith.constant 0 : index
    %c0_0 = arith.constant 0 : index
    %0 = vector.load %arg1[%c0, %c0_0] : memref<32x384xf32, #tpu.memory_space<vmem>>, vector<32x384xf32>
    %c0_1 = arith.constant 0 : index
    %c0_2 = arith.constant 0 : index
    %1 = vector.load %arg2[%c0_1, %c0_2] : memref<32x1xi32, #tpu.memory_space<vmem>>, vector<32x1xi32>
    %cst = arith.constant dense<0xFF800000> : vector<32xf32>
    %2 = vector.multi_reduction <maximumf>, %0, %cst [1] : vector<32x384xf32> to vector<32xf32>
    %3 = vector.shape_cast %2 : vector<32xf32> to vector<32x1xf32>
    %4 = vector.broadcast %3 : vector<32x1xf32> to vector<32x384xf32>
    %5 = arith.subf %0, %4 : vector<32x384xf32>
    %6 = math.exp %5 : vector<32x384xf32>
    %cst_3 = arith.constant dense<0.000000e+00> : vector<32xf32>
    %7 = vector.multi_reduction <add>, %6, %cst_3 [1] : vector<32x384xf32> to vector<32xf32>
    %8 = vector.shape_cast %7 : vector<32xf32> to vector<32x1xf32>
    %9 = math.log %8 : vector<32x1xf32>
    %10 = tpu.iota {dimensions = array<i32: 1>} : vector<32x384xi32>
    %11 = vector.broadcast %1 : vector<32x1xi32> to vector<32x384xi32>
    %12 = arith.cmpi eq, %10, %11 : vector<32x384xi32>
    %cst_4 = arith.constant 0.000000e+00 : f32
    %13 = vector.broadcast %cst_4 : f32 to vector<32x384xf32>
    %14 = arith.select %12, %5, %13 : vector<32x384xi1>, vector<32x384xf32>
    %cst_5 = arith.constant dense<0.000000e+00> : vector<32xf32>
    %15 = vector.multi_reduction <add>, %14, %cst_5 [1] : vector<32x384xf32> to vector<32xf32>
    %16 = vector.shape_cast %15 : vector<32xf32> to vector<32x1xf32>
    %cst_6 = arith.constant dense<0.000000e+00> : vector<32xf32>
    %17 = vector.multi_reduction <add>, %5, %cst_6 [1] : vector<32x384xf32> to vector<32xf32>
    %18 = vector.shape_cast %17 : vector<32xf32> to vector<32x1xf32>
    %19 = arith.subf %16, %9 : vector<32x1xf32>
    %cst_7 = arith.constant -0.899999976 : f32
    %20 = vector.broadcast %cst_7 : f32 to vector<32x1xf32>
    %21 = arith.mulf %20, %19 : vector<32x1xf32>
    %cst_8 = arith.constant 3.840000e+02 : f32
    %22 = vector.broadcast %cst_8 : f32 to vector<32x1xf32>
    %23 = arith.mulf %22, %9 : vector<32x1xf32>
    %24 = arith.subf %18, %23 : vector<32x1xf32>
    %cst_9 = arith.constant 2.6041668E-4 : f32
    %25 = vector.broadcast %cst_9 : f32 to vector<32x1xf32>
    %26 = arith.mulf %25, %24 : vector<32x1xf32>
    %27 = arith.subf %21, %26 : vector<32x1xf32>
    %c0_10 = arith.constant 0 : index
    %c0_11 = arith.constant 0 : index
    %28 = vector.load %arg3[%c0_10, %c0_11] : memref<32x1xf32, #tpu.memory_space<vmem>>, vector<32x1xf32>
    tpu.vector_store %arg3[%c0_10, %c0_11], %27 {strides = array<i32>} : memref<32x1xf32, #tpu.memory_space<vmem>>, vector<32x1xf32>,
    return
  }
  func.func @transform_0(%arg0: i32) -> (i32, i32) {
    %c0_i32 = arith.constant 0 : i32
    %c0_i32_0 = arith.constant 0 : i32
    return %arg0, %c0_i32 : i32, i32
  }
  func.func @transform_1(%arg0: i32) -> (i32, i32) {
    %c0_i32 = arith.constant 0 : i32
    %c0_i32_0 = arith.constant 0 : i32
    return %arg0, %c0_i32 : i32, i32
  }
  func.func @transform_2(%arg0: i32) -> (i32, i32) {
    %c0_i32 = arith.constant 0 : i32
    %c0_i32_0 = arith.constant 0 : i32
    return %arg0, %c0_i32 : i32, i32
  }
}

</mosaic_0001>

<llo_original>
// kernel: tpu_custom_call.1
$region0: #{tpu_custom_call.1}
  #allocation0 [shape = 'u32[]', space=smem, size = 0x4, offset = 0x4, fixed_abs, tag = 'smem constant byte address 0x4 - core index']
  #allocation1 [shape = 'u32[144,128]{1,0:T(1,128)}', space=vmem, size = 0x12000, scoped, tag = 'internal scratch']
  %s0 = inlined_call_operand.hbm [shape: f32[128,384], index: 0, kind: input, shape index: {}]
  %s1 = inlined_call_operand.vmem [shape: s32[128,1], index: 1, kind: input, shape index: {}]
  %s2 = inlined_call_operand.vmem [shape: f32[128,1], index: 2, kind: output, shape index: {}]
  %s3 = sld [smem:[#allocation0]]
  $region45: #{tpu_custom_call.1} parent=0
    _
  %s5 = ssub.s32 1, %s3
  %s6 = scalar_select 0, %s5, %s3
  $region1: #{tpu_custom_call.1} parent=0
    #allocation2 [shape = 'u8[98304]{0}', space=vmem, size = 0x18000, scoped, tag = 'input window, operand 0']
    #allocation3 [shape = 's32[2]{0}', space=sflag, size = 0x8, scoped, tag = 'scoped memory for tpu_custom_call.1']
    %7 = vsyncpa [#allocation3], 0
    %s8 = scalar_lea.sflag [#allocation3], 1
    %9 = vsyncpa %s8, 0
    loop: start=0, step=1, limit=6
    $region2: #{tpu_custom_call.1} parent=1 // loop_pre_header
      _
    $region3: #{tpu_custom_call.1} parent=1 // loop_header
      %s11 = sphi 0, %s15
      %p12 = scmp.ge.s32.totalorder %s11, 6
      %s21 = sphi 0, %s23
      %s24 = sphi 0, %s21
      %s25 = sphi 0, %s24
      %s41 = sphi 0, %s25
      %s47 = sphi 0, %s49
      %s50 = sphi 0, %s47
      %s51 = sphi 0, %s50
      %s67 = sphi 0, %s51
      %s73 = sphi 0, %s75
      %s76 = sphi 0, %s73
      %s77 = sphi 0, %s76
      %s93 = sphi 0, %s77
    $region4: #{tpu_custom_call.1} parent=1 // loop_header_branch
      %14 = sbr.rel (%p12) target = $region8
    $region5: #{tpu_custom_call.1} parent=1 // loop_body
      %s16 = ssub.s32 %s11, 1
      %s17 = ssub.s32 %s11, 2
      %s18 = sadd.s32 %s11, 1
      %s19 = ssub.s32 %s11, %s18
      %p20 = scmp.eq.s32.totalorder %s19, 0
      %s22 = sadd.s32 %s21, 1
      %s23 = scalar_select %p20, %s21, %s22
      %p26 = pneg %p20
      %p27 = scmp.eq.s32.totalorder %s11, 3
      %p28 = por %p26, %p27
      %p29 = scmp.ne.s32.totalorder %s21, %s24
      %p30 = scmp.eq.s32.totalorder %s11, 0
      %p31 = por %p29, %p30
      %p32 = scmp.ne.s32.totalorder %s21, %s24
      %p33 = scmp.eq.s32.totalorder %s16, 3
      %p34 = por %p32, %p33
      %p35 = scmp.ne.s32.totalorder %s24, %s25
      %p36 = scmp.eq.s32.totalorder %s16, 0
      %p37 = por %p35, %p36
      %p38 = scmp.ne.s32.totalorder %s24, %s25
      %p39 = scmp.eq.s32.totalorder %s17, 3
      %p40 = por %p38, %p39
      %p42 = scmp.ne.s32.totalorder %s25, %s41
      %p43 = scmp.eq.s32.totalorder %s17, 0
      %p44 = por %p42, %p43
      %s45 = ssub.s32 %s11, %s18
      %p46 = scmp.eq.s32.totalorder %s45, 0
      %s48 = sadd.s32 %s47, 1
      %s49 = scalar_select %p46, %s47, %s48
      %p52 = pneg %p46
      %p53 = scmp.eq.s32.totalorder %s11, 3
      %p54 = por %p52, %p53
      %p55 = scmp.ne.s32.totalorder %s47, %s50
      %p56 = scmp.eq.s32.totalorder %s11, 0
      %p57 = por %p55, %p56
      %p58 = scmp.ne.s32.totalorder %s47, %s50
      %p59 = scmp.eq.s32.totalorder %s16, 3
      %p60 = por %p58, %p59
      %p61 = scmp.ne.s32.totalorder %s50, %s51
      %p62 = scmp.eq.s32.totalorder %s16, 0
      %p63 = por %p61, %p62
      %p64 = scmp.ne.s32.totalorder %s50, %s51
      %p65 = scmp.eq.s32.totalorder %s17, 3
      %p66 = por %p64, %p65
      %p68 = scmp.ne.s32.totalorder %s51, %s67
      %p69 = scmp.eq.s32.totalorder %s17, 0
      %p70 = por %p68, %p69
      %s71 = ssub.s32 %s11, %s18
      %p72 = scmp.eq.s32.totalorder %s71, 0
      %s74 = sadd.s32 %s73, 1
      %s75 = scalar_select %p72, %s73, %s74
      %p78 = pneg %p72
      %p79 = scmp.eq.s32.totalorder %s11, 3
      %p80 = por %p78, %p79
      %p81 = scmp.ne.s32.totalorder %s73, %s76
      %p82 = scmp.eq.s32.totalorder %s11, 0
      %p83 = por %p81, %p82
      %p84 = scmp.ne.s32.totalorder %s73, %s76
      %p85 = scmp.eq.s32.totalorder %s16, 3
      %p86 = por %p84, %p85
      %p87 = scmp.ne.s32.totalorder %s76, %s77
      %p88 = scmp.eq.s32.totalorder %s16, 0
      %p89 = por %p87, %p88
      %p90 = scmp.ne.s32.totalorder %s76, %s77
      %p91 = scmp.eq.s32.totalorder %s17, 3
      %p92 = por %p90, %p91
      %p94 = scmp.ne.s32.totalorder %s77, %s93
      %p95 = scmp.eq.s32.totalorder %s17, 0
      %p96 = por %p94, %p95
      %p97 = scmp.le.s32.totalorder 1, %s11
      %p98 = scmp.lt.s32.totalorder %s11, 5
      %p99 = pnand %p97, %p98
      %p100 = pneg %p99
      // Predicated region
      $region9: #{tpu_custom_call.1} parent=5 // pred_check
        _
      $region10: #{tpu_custom_call.1} parent=5 // pred_check_branch
        %102 = sbr.rel (%p99) target = $region12
      $region11: #{tpu_custom_call.1} parent=5 // pred_region
        %s103 = ssub.s32 %s11, 1
      $region12: #{tpu_custom_call.1} parent=5 // pred_fallthru
        _
      %p104 = scmp.lt.s32.totalorder %s11, 4
      // Predicated region
      $region13: #{tpu_custom_call.1} parent=5 // pred_check
        %p105 = pneg %p104
      $region14: #{tpu_custom_call.1} parent=5 // pred_check_branch
        %107 = sbr.rel (%p105) target = $region16
      $region15: #{tpu_custom_call.1} parent=5 // pred_region
        // Predicated region
        $region17: #{tpu_custom_call.1} parent=15 // pred_check
          %p108 = pneg %p31
        $region18: #{tpu_custom_call.1} parent=15 // pred_check_branch
          %110 = sbr.rel (%p108) target = $region20
        $region19: #{tpu_custom_call.1} parent=15 // pred_region
          %s111 = sand.u32 %s21, 1
          %s112 = scalar_lea.sflag [#allocation3], %s111
          %s113 = sand.u32 %s21, 1
          %s114 = smul.addr %s113, 96
          %s115 = scalar_lea.vmem [#allocation2], %s114
          %s116 = smul.u32 4, %s11
          %s118 = ssub.s32 1536, 1536
          %119 = vsyncadd %s112, %s118
          %s120 = smul.addr %s116, 3
          %s121 = smul.addr %s120, 128
          %s122 = scalar_lea.hbm %s0, %s121
          %s123 = sshll.u32 %s115, 4
          %s124 = int_to_ptr.vmem [resolvable:$true] %s123
          %129 = dma.hbm_to_vmem [thread:$0]  %s122, 1536, %s124, %s112, 384, 384, 24
        $region20: #{tpu_custom_call.1} parent=15 // pred_fallthru
          _
        // Predicated region
        $region21: #{tpu_custom_call.1} parent=15 // pred_check
          %p130 = pneg %p57
        $region22: #{tpu_custom_call.1} parent=15 // pred_check_branch
          %132 = sbr.rel (%p130) target = $region24
        $region23: #{tpu_custom_call.1} parent=15 // pred_region
          %s133 = smul.u32 4, %s11
          %p134 = scmp.lt.s32.totalorder %s133, 15
          %s135 = scalar_select %p134, %s133, 15
          %s136 = smul.addr %s135, 8
          %s137 = scalar_lea.vmem %s1, %s136
          %s138 = smul.u32 4, %s11
        $region24: #{tpu_custom_call.1} parent=15 // pred_fallthru
          _
      $region16: #{tpu_custom_call.1} parent=5 // pred_fallthru
        _
      %p139 = scmp.le.s32.totalorder 1, %s11
      %p140 = scmp.lt.s32.totalorder %s11, 5
      %p141 = pnand %p139, %p140
      %p142 = pneg %p141
      // Predicated region
      $region25: #{tpu_custom_call.1} parent=5 // pred_check
        _
      $region26: #{tpu_custom_call.1} parent=5 // pred_check_branch
        %144 = sbr.rel (%p141) target = $region28
      $region27: #{tpu_custom_call.1} parent=5 // pred_region
        %s145 = ssub.s32 %s11, 1
        %s146 = sand.u32 %s24, 1
        %s147 = scalar_lea.sflag [#allocation3], %s146
        %s148 = sand.u32 %s24, 1
        %s149 = smul.addr %s148, 96
        %s150 = scalar_lea.vmem [#allocation2], %s149
        // Predicated region
        $region29: #{tpu_custom_call.1} parent=27 // pred_check
          %p151 = pneg %p37
        $region30: #{tpu_custom_call.1} parent=27 // pred_check_branch
          %153 = sbr.rel (%p151) target = $region32
        $region31: #{tpu_custom_call.1} parent=27 // pred_region
          %154 = dma.done %s147, 1536
        $region32: #{tpu_custom_call.1} parent=27 // pred_fallthru
          _
        %s155 = sand.u32 %s24, 1
        %s156 = scalar_lea.sflag [#allocation3], %s155
        %s157 = sand.u32 %s24, 1
        %s158 = smul.addr %s157, 96
        %s159 = scalar_lea.vmem [#allocation2], %s158
        %p160 = pneg %p37
        %p161 = pneg %p34
        %s162 = smul.u32 4, %s16
        %p163 = scmp.lt.s32.totalorder %s162, 15
        %s164 = scalar_select %p163, %s162, 15
        %s165 = smul.addr %s164, 8
        %s166 = scalar_lea.vmem %s1, %s165
        %p167 = pneg %p63
        %p168 = pneg %p60
        %p169 = pneg %p89
        %p170 = pneg %p86
        %s171 = smul.u32 4, %s16
        %p172 = scmp.lt.s32.totalorder %s171, 15
        %s173 = scalar_select %p172, %s171, 15
        %s174 = smul.addr %s173, 8
        %s175 = scalar_lea.vmem %s2, %s174
        %s176 = smul.u32 4, %s16
        %s177 = smul.u32 4, %s16
        %p178 = scmp.lt.s32.totalorder %s177, 15
        %s179 = scalar_select %p178, %s177, 15
        %s180 = smul.addr %s179, 8
        %s181 = scalar_lea.vmem %s1, %s180
        %s182 = smul.u32 4, %s16
        %s183 = smul.u32 4, %s16
        %p184 = scmp.lt.s32.totalorder %s183, 15
        %s185 = scalar_select %p184, %s183, 15
        %s186 = smul.addr %s185, 8
        %s187 = scalar_lea.vmem %s2, %s186
        %s188 = smul.u32 4, %s16
        %v189 = vld [vmem:[%s150] sm:$0xff]
        %v190 = vld [vmem:[%s150 + $0x8] sm:$0xff]
        %v191 = vld [vmem:[%s150 + $0x10] sm:$0xff]
        %v192 = vld [vmem:[%s150 + $0x18] sm:$0xff]
        %v193 = vld [vmem:[%s150 + $0x20] sm:$0xff]
        %v194 = vld [vmem:[%s150 + $0x28] sm:$0xff]
        %v195 = vld [vmem:[%s150 + $0x30] sm:$0xff]
        %v196 = vld [vmem:[%s150 + $0x38] sm:$0xff]
        %v197 = vld [vmem:[%s150 + $0x40] sm:$0xff]
        %v198 = vld [vmem:[%s150 + $0x48] sm:$0xff]
        %v199 = vld [vmem:[%s150 + $0x50] sm:$0xff]
        %v200 = vld [vmem:[%s150 + $0x58] sm:$0xff]
        %v201 = vld [vmem:[%s181] sm:$0xff]
        %v202 = vld [vmem:[%s181 + $0x8] sm:$0xff]
        %v203 = vld [vmem:[%s181 + $0x10] sm:$0xff]
        %v204 = vld [vmem:[%s181 + $0x18] sm:$0xff]
        %v205 = vmax.f32 %v189, %v190
        %v206 = vmax.f32 %v205, %v191
        %207 = vmax.xlane.f32.xlu0 %v206
        %v208 = vpop.xlane.xlu0 %207
        %v209 = vmax.f32 %v192, %v193
        %v210 = vmax.f32 %v209, %v194
        %211 = vmax.xlane.f32.xlu0 %v210
        %v212 = vpop.xlane.xlu0 %211
        %v213 = vmax.f32 %v195, %v196
        %v214 = vmax.f32 %v213, %v197
        %215 = vmax.xlane.f32.xlu0 %v214
        %v216 = vpop.xlane.xlu0 %215
        %v217 = vmax.f32 %v198, %v199
        %v218 = vmax.f32 %v217, %v200
        %219 = vmax.xlane.f32.xlu0 %v218
        %v220 = vpop.xlane.xlu0 %219
        %v221 = vsub.f32 %v189, %v208
        %v222 = vsub.f32 %v190, %v208
        %v223 = vsub.f32 %v191, %v208
        %v224 = vsub.f32 %v192, %v212
        %v225 = vsub.f32 %v193, %v212
        %v226 = vsub.f32 %v194, %v212
        %v227 = vsub.f32 %v195, %v216
        %v228 = vsub.f32 %v196, %v216
        %v229 = vsub.f32 %v197, %v216
        %v230 = vsub.f32 %v198, %v220
        %v231 = vsub.f32 %v199, %v220
        %v232 = vsub.f32 %v200, %v220
        %v233 = vmul.f32 %v221, 1.442695
        %v234 = vpow.pop %v233
        %v235 = vmul.f32 %v222, 1.442695
        %v236 = vpow.pop %v235
        %v237 = vmul.f32 %v223, 1.442695
        %v238 = vpow.pop %v237
        %v239 = vmul.f32 %v224, 1.442695
        %v240 = vpow.pop %v239
        %v241 = vmul.f32 %v225, 1.442695
        %v242 = vpow.pop %v241
        %v243 = vmul.f32 %v226, 1.442695
        %v244 = vpow.pop %v243
        %v245 = vmul.f32 %v227, 1.442695
        %v246 = vpow.pop %v245
        %v247 = vmul.f32 %v228, 1.442695
        %v248 = vpow.pop %v247
        %v249 = vmul.f32 %v229, 1.442695
        %v250 = vpow.pop %v249
        %v251 = vmul.f32 %v230, 1.442695
        %v252 = vpow.pop %v251
        %v253 = vmul.f32 %v231, 1.442695
        %v254 = vpow.pop %v253
        %v255 = vmul.f32 %v232, 1.442695
        %v256 = vpow.pop %v255
        %v257 = vadd.f32 %v234, %v236
        %v258 = vadd.f32 %v257, %v238
        %259 = vadd.xlane.f32.xlu0 %v258
        %v260 = vpop.xlane.xlu0 %259
        %v261 = vadd.f32 %v240, %v242
        %v262 = vadd.f32 %v261, %v244
        %263 = vadd.xlane.f32.xlu0 %v262
        %v264 = vpop.xlane.xlu0 %263
        %v265 = vadd.f32 %v246, %v248
        %v266 = vadd.f32 %v265, %v250
        %267 = vadd.xlane.f32.xlu0 %v266
        %v268 = vpop.xlane.xlu0 %267
        %v269 = vadd.f32 %v252, %v254
        %v270 = vadd.f32 %v269, %v256
        %271 = vadd.xlane.f32.xlu0 %v270
        %v272 = vpop.xlane.xlu0 %271
        %v273 = vlog2.pop %v260
        %v274 = vmul.f32 %v273, 0.6931472
        %v275 = vlog2.pop %v264
        %v276 = vmul.f32 %v275, 0.6931472
        %v277 = vlog2.pop %v268
        %v278 = vmul.f32 %v277, 0.6931472
        %v279 = vlog2.pop %v272
        %v280 = vmul.f32 %v279, 0.6931472
        %v281 = vlaneseq
        %v282 = vand.u32 %v281, 127
        %v283 = vadd.s32 %v282, 128
        %v284 = vadd.s32 %v282, 256
        %285 = vset.pattern.permute.xlu0 0
        %286 = vperm.xlu0 %285, %v201
        %v287 = vpop.permute.xlu0 %286
        %288 = vset.pattern.permute.xlu0 0
        %289 = vperm.xlu0 %288, %v202
        %v290 = vpop.permute.xlu0 %289
        %291 = vset.pattern.permute.xlu0 0
        %292 = vperm.xlu0 %291, %v203
        %v293 = vpop.permute.xlu0 %292
        %294 = vset.pattern.permute.xlu0 0
        %295 = vperm.xlu0 %294, %v204
        %v296 = vpop.permute.xlu0 %295
        %vm297 = vcmp.eq.s32.totalorder %v282, %v287
        %vm298 = vcmp.eq.s32.totalorder %v283, %v287
        %vm299 = vcmp.eq.s32.totalorder %v284, %v287
        %vm300 = vcmp.eq.s32.totalorder %v282, %v290
        %vm301 = vcmp.eq.s32.totalorder %v283, %v290
        %vm302 = vcmp.eq.s32.totalorder %v284, %v290
        %vm303 = vcmp.eq.s32.totalorder %v282, %v293
        %vm304 = vcmp.eq.s32.totalorder %v283, %v293
        %vm305 = vcmp.eq.s32.totalorder %v284, %v293
        %vm306 = vcmp.eq.s32.totalorder %v282, %v296
        %vm307 = vcmp.eq.s32.totalorder %v283, %v296
        %vm308 = vcmp.eq.s32.totalorder %v284, %v296
        %v309 = vsel %vm297, %v221, 0.0
        %v310 = vsel %vm298, %v222, 0.0
        %v311 = vsel %vm299, %v223, 0.0
        %v312 = vsel %vm300, %v224, 0.0
        %v313 = vsel %vm301, %v225, 0.0
        %v314 = vsel %vm302, %v226, 0.0
        %v315 = vsel %vm303, %v227, 0.0
        %v316 = vsel %vm304, %v228, 0.0
        %v317 = vsel %vm305, %v229, 0.0
        %v318 = vsel %vm306, %v230, 0.0
        %v319 = vsel %vm307, %v231, 0.0
        %v320 = vsel %vm308, %v232, 0.0
        %v321 = vadd.f32 %v309, %v310
        %v322 = vadd.f32 %v321, %v311
        %323 = vadd.xlane.f32.xlu0 %v322
        %v324 = vpop.xlane.xlu0 %323
        %v325 = vadd.f32 %v312, %v313
        %v326 = vadd.f32 %v325, %v314
        %327 = vadd.xlane.f32.xlu0 %v326
        %v328 = vpop.xlane.xlu0 %327
        %v329 = vadd.f32 %v315, %v316
        %v330 = vadd.f32 %v329, %v317
        %331 = vadd.xlane.f32.xlu0 %v330
        %v332 = vpop.xlane.xlu0 %331
        %v333 = vadd.f32 %v318, %v319
        %v334 = vadd.f32 %v333, %v320
        %335 = vadd.xlane.f32.xlu0 %v334
        %v336 = vpop.xlane.xlu0 %335
        %v337 = vadd.f32 %v221, %v222
        %v338 = vadd.f32 %v337, %v223
        %339 = vadd.xlane.f32.xlu0 %v338
        %v340 = vpop.xlane.xlu0 %339
        %v341 = vadd.f32 %v224, %v225
        %v342 = vadd.f32 %v341, %v226
        %343 = vadd.xlane.f32.xlu0 %v342
        %v344 = vpop.xlane.xlu0 %343
        %v345 = vadd.f32 %v227, %v228
        %v346 = vadd.f32 %v345, %v229
        %347 = vadd.xlane.f32.xlu0 %v346
        %v348 = vpop.xlane.xlu0 %347
        %v349 = vadd.f32 %v230, %v231
        %v350 = vadd.f32 %v349, %v232
        %351 = vadd.xlane.f32.xlu0 %v350
        %v352 = vpop.xlane.xlu0 %351
        %v353 = vsub.f32 %v324, %v274
        %v354 = vsub.f32 %v328, %v276
        %v355 = vsub.f32 %v332, %v278
        %v356 = vsub.f32 %v336, %v280
        %v357 = vmul.f32 %v353, -0.9
        %v358 = vmul.f32 %v354, -0.9
        %v359 = vmul.f32 %v355, -0.9
        %v360 = vmul.f32 %v356, -0.9
        %v361 = vmul.f32 %v274, 384.0
        %v362 = vmul.f32 %v276, 384.0
        %v363 = vmul.f32 %v278, 384.0
        %v364 = vmul.f32 %v280, 384.0
        %v365 = vsub.f32 %v340, %v361
        %v366 = vsub.f32 %v344, %v362
        %v367 = vsub.f32 %v348, %v363
        %v368 = vsub.f32 %v352, %v364
        %v369 = vmul.f32 %v365, 0.00026041668
        %v370 = vmul.f32 %v366, 0.00026041668
        %v371 = vmul.f32 %v367, 0.00026041668
        %v372 = vmul.f32 %v368, 0.00026041668
        %v373 = vsub.f32 %v357, %v369
        %v374 = vsub.f32 %v358, %v370
        %v375 = vsub.f32 %v359, %v371
        %v376 = vsub.f32 %v360, %v372
        %vm377 = vcmask 7168
        %378 = vst.msk [vmem:[%s187] sm:$0xff] %vm377, %v373
        %379 = vst.msk [vmem:[%s187 + $0x8] sm:$0xff] %vm377, %v374
        %380 = vst.msk [vmem:[%s187 + $0x10] sm:$0xff] %vm377, %v375
        %381 = vst.msk [vmem:[%s187 + $0x18] sm:$0xff] %vm377, %v376
        %s382 = smul.u32 4, %s16
        %p383 = scmp.lt.s32.totalorder %s382, 15
        %s384 = scalar_select %p383, %s382, 15
        %s385 = smul.addr %s384, 8
        %s386 = scalar_lea.vmem %s2, %s385
        // Predicated region
        $region33: #{tpu_custom_call.1} parent=27 // pred_check
          %p387 = pneg %p86
        $region34: #{tpu_custom_call.1} parent=27 // pred_check_branch
          %389 = sbr.rel (%p387) target = $region36
        $region35: #{tpu_custom_call.1} parent=27 // pred_region
          %s390 = smul.u32 4, %s16
        $region36: #{tpu_custom_call.1} parent=27 // pred_fallthru
          _
      $region28: #{tpu_custom_call.1} parent=5 // pred_fallthru
        _
      %p391 = scmp.le.s32.totalorder 2, %s11
      // Predicated region
      $region37: #{tpu_custom_call.1} parent=5 // pred_check
        %p392 = pneg %p391
      $region38: #{tpu_custom_call.1} parent=5 // pred_check_branch
        %394 = sbr.rel (%p392) target = $region40
      $region39: #{tpu_custom_call.1} parent=5 // pred_region
        %s395 = ssub.s32 %s11, 2
        // Predicated region
        $region41: #{tpu_custom_call.1} parent=39 // pred_check
          %p396 = pneg %p92
        $region42: #{tpu_custom_call.1} parent=39 // pred_check_branch
          %398 = sbr.rel (%p396) target = $region44
        $region43: #{tpu_custom_call.1} parent=39 // pred_region
          %s399 = smul.u32 4, %s17
          %p400 = scmp.lt.s32.totalorder %s399, 15
          %s401 = scalar_select %p400, %s399, 15
          %s402 = smul.addr %s401, 8
          %s403 = scalar_lea.vmem %s2, %s402
        $region44: #{tpu_custom_call.1} parent=39 // pred_fallthru
          _
      $region40: #{tpu_custom_call.1} parent=5 // pred_fallthru
        _
    $region6: #{tpu_custom_call.1} parent=1 // loop_footer
      %s15 = sadd.s32 1, %s11
    $region7: #{tpu_custom_call.1} parent=1 // loop_footer_branch
      %10 = sbr.rel target = $region3
    $region8: #{tpu_custom_call.1} parent=1 // loop_exit
      _
    %404 = vsyncpa [#allocation3], 1
    %s405 = scalar_lea.sflag [#allocation3], 1
    %406 = vsyncpa %s405, 1

</llo_original>
